<compile_context>
chip_gen: v5e
topology: v5e:2x2
jax: 0.10.0
libtpu: 0.0.40
codegen_flags: <defaults>
</compile_context>

<pallas_src>
import functools

import jax
import jax.numpy as jnp
from jax.experimental import pallas as pl
from jax.experimental.pallas import tpu as pltpu


def dueling_ff_kernel(num_inputs, num_actions,
                      x_ref, w_ref, b_ref, out_ref):
    # x_ref: (B, num_inputs)   w_ref: (5, hn, hn)   b_ref: (5, hn)
    x = x_ref[...]
    b = b_ref[...]
    relu = lambda v: jnp.maximum(v, 0.0)

    # Feature trunk: Linear -> ReLU, three times.
    # w_ref[0] has its rows zero-padded to hn; static slice back to the live
    # num_inputs rows (multiple-of-8 sublane slice, no data movement needed).
    h = relu(jnp.dot(x, w_ref[0][:num_inputs, :],
                     preferred_element_type=jnp.float32) + b[0:1, :])
    h = relu(jnp.dot(h, w_ref[1],
                     preferred_element_type=jnp.float32) + b[1:2, :])
    h = relu(jnp.dot(h, w_ref[2],
                     preferred_element_type=jnp.float32) + b[2:3, :])

    # Fused heads, layer 1: [advantage_hidden | value_hidden] in one matmul.
    hh = relu(jnp.dot(h, w_ref[3],
                      preferred_element_type=jnp.float32) + b[3:4, :])

    # Fused heads, layer 2: block-diagonal (zero-padded) weight
    #   q[:, :A]      = advantage
    #   q[:, A:A+1]   = value
    #   q[:, A+1:]    = exact zeros (dead padding columns)
    q = jnp.dot(hh, w_ref[4], preferred_element_type=jnp.float32) + b[4:5, :]
    adv = q[:, :num_actions]
    val = q[:, num_actions:num_actions + 1]

    # Q = V + A - mean(A); torch's advantage.mean() is a GLOBAL scalar mean.
    out_ref[...] = val + adv - jnp.mean(adv)


def _pad2(a, rows, cols):
    """Zero-pad a 2-D array up to (rows, cols)."""
    return jnp.zeros((rows, cols), a.dtype).at[:a.shape[0], :a.shape[1]].set(a)


def pack_params(params):
    """Fuse head weights and pack ALL weights/biases into two stacked operands."""
    num_inputs, hn = params["w1"].shape
    nh2, num_actions = params["wa2"].shape
    if num_inputs > hn or num_actions + 1 > hn:
        raise NotImplementedError(
            "pack_params assumes num_inputs <= hn and num_actions + 1 <= hn")

    # Trunk layer 1: rows zero-padded up to hn (exact).
    w1p = _pad2(params["w1"], hn, hn)

    # Head layer 1: column-concat (exact), then pad cols to hn if hn is odd.
    wh1 = _pad2(jnp.concatenate([params["wa1"], params["wv1"]], axis=1), hn, hn)
    bh1 = _pad2(jnp.concatenate([params["ba1"], params["bv1"]], axis=1), 1, hn)

    # Head layer 2: block-diagonal, zero-padded to (hn, hn) (zeros contribute 0).
    wh2 = jnp.zeros((hn, hn), jnp.float32)
    wh2 = wh2.at[:nh2, :num_actions].set(params["wa2"])
    wh2 = wh2.at[nh2:2 * nh2, num_actions:num_actions + 1].set(params["wv2"])
    bh2 = jnp.zeros((1, hn), jnp.float32)
    bh2 = bh2.at[:, :num_actions].set(params["ba2"])
    bh2 = bh2.at[:, num_actions:num_actions + 1].set(params["bv2"])

    # Single weight stack and single bias stack -> 2 operand DMAs total.
    w_stack = jnp.stack([w1p, params["w2"], params["w3"], wh1, wh2], axis=0)
    b_stack = jnp.concatenate(
        [params["b1"], params["b2"], params["b3"], bh1, bh2], axis=0)

    return {
        "num_inputs": num_inputs,
        "num_actions": num_actions,
        "w": w_stack,      # (5, hn, hn)
        "b": b_stack,      # (5, hn)
    }


def dueling_ff_forward(x, packed):
    """x: (B, num_inputs) float32.  packed: output of pack_params()."""
    B = x.shape[0]
    num_actions = packed["num_actions"]
    kernel = functools.partial(
        dueling_ff_kernel, packed["num_inputs"], num_actions)
    vmem_spec = pl.BlockSpec(memory_space=pltpu.MemorySpace.VMEM)
    return pl.pallas_call(
        kernel,
        out_shape=jax.ShapeDtypeStruct((B, num_actions), jnp.float32),
        in_specs=[vmem_spec, vmem_spec, vmem_spec],
        out_specs=vmem_spec,
    )(x, packed["w"], packed["b"])


def init_params(key, num_inputs, num_outputs, hn):
    """Deterministic synthetic init mimicking PyTorch Linear default
    (uniform in +/- 1/sqrt(fan_in)).  Weights stored as (in, out)."""
    nh2 = int(hn / 2)
    dims = {
        "w1": (num_inputs, hn), "b1": (1, hn),
        "w2": (hn, hn),         "b2": (1, hn),
        "w3": (hn, hn),         "b3": (1, hn),
        "wa1": (hn, nh2),       "ba1": (1, nh2),
        "wa2": (nh2, num_outputs), "ba2": (1, num_outputs),
        "wv1": (hn, nh2),       "bv1": (1, nh2),
        "wv2": (nh2, 1),        "bv2": (1, 1),
    }
    fan_in = {
        "w1": num_inputs, "b1": num_inputs,
        "w2": hn, "b2": hn,
        "w3": hn, "b3": hn,
        "wa1": hn, "ba1": hn,
        "wa2": nh2, "ba2": nh2,
        "wv1": hn, "bv1": hn,
        "wv2": nh2, "bv2": nh2,
    }
    params = {}
    keys = jax.random.split(key, len(dims))
    for k_rng, (name, shape) in zip(keys, sorted(dims.items())):
        bound = 1.0 / jnp.sqrt(jnp.float32(fan_in[name]))
        params[name] = jax.random.uniform(
            k_rng, shape, dtype=jnp.float32, minval=-bound, maxval=bound)
    return params


def reference_forward(x, params):
    """Plain-JAX reference matching the PyTorch forward (unfused)."""
    h = jnp.maximum(x @ params["w1"] + params["b1"], 0.0)
    h = jnp.maximum(h @ params["w2"] + params["b2"], 0.0)
    h = jnp.maximum(h @ params["w3"] + params["b3"], 0.0)
    a = jnp.maximum(h @ params["wa1"] + params["ba1"], 0.0)
    adv = a @ params["wa2"] + params["ba2"]
    v = jnp.maximum(h @ params["wv1"] + params["bv1"], 0.0)
    val = v @ params["wv2"] + params["bv2"]
    return val + adv - jnp.mean(adv)


if __name__ == "__main__":
    # Shapes consistent with the module: num_inputs=16, hidden=32 (nh2=16),
    # num_outputs=4.  Batch=128 amortizes fixed launch/DMA overhead and fills
    # the MXU M dimension; the kernel itself is batch-agnostic and everything
    # fits trivially in VMEM.
    B, num_inputs, num_outputs, hn = 128, 16, 4, 32

    key = jax.random.PRNGKey(0)
    kx, kp = jax.random.split(key)
    x = jax.random.normal(kx, (B, num_inputs), dtype=jnp.float32)
    params = init_params(kp, num_inputs, num_outputs, hn)
    packed = pack_params(params)

    out = dueling_ff_forward(x, packed)
    out = jax.block_until_ready(out)

    ref = reference_forward(x, params)
    assert out.shape == (B, num_outputs)
    assert jnp.allclose(out, ref, atol=1e-5, rtol=1e-5)
    print("KERNEL_OK")
</pallas_src>

<mosaic_0001>
module attributes {stable_mosaic.version = 11 : i64} {
  func.func @dueling_ff_kernel(%arg0: memref<128x16xf32, #tpu.memory_space<vmem>>, %arg1: memref<5x32x32xf32, #tpu.memory_space<vmem>>, %arg2: memref<5x32xf32, #tpu.memory_space<vmem>>, %arg3: memref<128x4xf32, #tpu.memory_space<vmem>>) attributes {dimension_semantics = [], scalar_prefetch = 0 : i64, scratch_operands = 0 : i64, tpu.core_type = #tpu.core_type<tc>} {
    %c0 = arith.constant 0 : index
    %c0_0 = arith.constant 0 : index
    %0 = vector.load %arg0[%c0, %c0_0] : memref<128x16xf32, #tpu.memory_space<vmem>>, vector<128x16xf32>
    %c0_1 = arith.constant 0 : index
    %c0_2 = arith.constant 0 : index
    %1 = vector.load %arg2[%c0_1, %c0_2] : memref<5x32xf32, #tpu.memory_space<vmem>>, vector<5x32xf32>
    %c0_3 = arith.constant 0 : index
    %c0_4 = arith.constant 0 : index
    %c0_5 = arith.constant 0 : index
    %2 = vector.load %arg1[%c0_3, %c0_4, %c0_5] : memref<5x32x32xf32, #tpu.memory_space<vmem>>, vector<1x32x32xf32>
    %3 = vector.shape_cast %2 : vector<1x32x32xf32> to vector<32x32xf32>
    %4 = vector.extract_strided_slice %3 {offsets = [0, 0], sizes = [16, 32], strides = [1, 1]} : vector<32x32xf32> to vector<16x32xf32>
    %cst = arith.constant dense<0.000000e+00> : vector<128x32xf32>
    %5 = tpu.matmul %0, %4, %cst {dimension_numbers = #tpu.dot_dimension_numbers<[1], [0], [0], [1], [0, 0, 1, 1], [], []>} : vector<128x16xf32>, vector<16x32xf32>, vector<128x32xf32> -> vector<128x32xf32>
    %6 = vector.extract_strided_slice %1 {offsets = [0, 0], sizes = [1, 32], strides = [1, 1]} : vector<5x32xf32> to vector<1x32xf32>
    %7 = vector.broadcast %6 : vector<1x32xf32> to vector<128x32xf32>
    %8 = arith.addf %5, %7 : vector<128x32xf32>
    %cst_6 = arith.constant 0.000000e+00 : f32
    %9 = vector.broadcast %cst_6 : f32 to vector<128x32xf32>
    %10 = arith.maximumf %8, %9 : vector<128x32xf32>
    %c1 = arith.constant 1 : index
    %c0_7 = arith.constant 0 : index
    %c0_8 = arith.constant 0 : index
    %11 = vector.load %arg1[%c1, %c0_7, %c0_8] : memref<5x32x32xf32, #tpu.memory_space<vmem>>, vector<1x32x32xf32>
    %12 = vector.shape_cast %11 : vector<1x32x32xf32> to vector<32x32xf32>
    %cst_9 = arith.constant dense<0.000000e+00> : vector<128x32xf32>
    %13 = tpu.matmul %10, %12, %cst_9 {dimension_numbers = #tpu.dot_dimension_numbers<[1], [0], [0], [1], [0, 0, 1, 1], [], []>} : vector<128x32xf32>, vector<32x32xf32>, vector<128x32xf32> -> vector<128x32xf32>
    %14 = vector.extract_strided_slice %1 {offsets = [1, 0], sizes = [1, 32], strides = [1, 1]} : vector<5x32xf32> to vector<1x32xf32>
    %15 = vector.broadcast %14 : vector<1x32xf32> to vector<128x32xf32>
    %16 = arith.addf %13, %15 : vector<128x32xf32>
    %cst_10 = arith.constant 0.000000e+00 : f32
    %17 = vector.broadcast %cst_10 : f32 to vector<128x32xf32>
    %18 = arith.maximumf %16, %17 : vector<128x32xf32>
    %c2 = arith.constant 2 : index
    %c0_11 = arith.constant 0 : index
    %c0_12 = arith.constant 0 : index
    %19 = vector.load %arg1[%c2, %c0_11, %c0_12] : memref<5x32x32xf32, #tpu.memory_space<vmem>>, vector<1x32x32xf32>
    %20 = vector.shape_cast %19 : vector<1x32x32xf32> to vector<32x32xf32>
    %cst_13 = arith.constant dense<0.000000e+00> : vector<128x32xf32>
    %21 = tpu.matmul %18, %20, %cst_13 {dimension_numbers = #tpu.dot_dimension_numbers<[1], [0], [0], [1], [0, 0, 1, 1], [], []>} : vector<128x32xf32>, vector<32x32xf32>, vector<128x32xf32> -> vector<128x32xf32>
    %22 = vector.extract_strided_slice %1 {offsets = [2, 0], sizes = [1, 32], strides = [1, 1]} : vector<5x32xf32> to vector<1x32xf32>
    %23 = vector.broadcast %22 : vector<1x32xf32> to vector<128x32xf32>
    %24 = arith.addf %21, %23 : vector<128x32xf32>
    %cst_14 = arith.constant 0.000000e+00 : f32
    %25 = vector.broadcast %cst_14 : f32 to vector<128x32xf32>
    %26 = arith.maximumf %24, %25 : vector<128x32xf32>
    %c3 = arith.constant 3 : index
    %c0_15 = arith.constant 0 : index
    %c0_16 = arith.constant 0 : index
    %27 = vector.load %arg1[%c3, %c0_15, %c0_16] : memref<5x32x32xf32, #tpu.memory_space<vmem>>, vector<1x32x32xf32>
    %28 = vector.shape_cast %27 : vector<1x32x32xf32> to vector<32x32xf32>
    %cst_17 = arith.constant dense<0.000000e+00> : vector<128x32xf32>
    %29 = tpu.matmul %26, %28, %cst_17 {dimension_numbers = #tpu.dot_dimension_numbers<[1], [0], [0], [1], [0, 0, 1, 1], [], []>} : vector<128x32xf32>, vector<32x32xf32>, vector<128x32xf32> -> vector<128x32xf32>
    %30 = vector.extract_strided_slice %1 {offsets = [3, 0], sizes = [1, 32], strides = [1, 1]} : vector<5x32xf32> to vector<1x32xf32>
    %31 = vector.broadcast %30 : vector<1x32xf32> to vector<128x32xf32>
    %32 = arith.addf %29, %31 : vector<128x32xf32>
    %cst_18 = arith.constant 0.000000e+00 : f32
    %33 = vector.broadcast %cst_18 : f32 to vector<128x32xf32>
    %34 = arith.maximumf %32, %33 : vector<128x32xf32>
    %c4 = arith.constant 4 : index
    %c0_19 = arith.constant 0 : index
    %c0_20 = arith.constant 0 : index
    %35 = vector.load %arg1[%c4, %c0_19, %c0_20] : memref<5x32x32xf32, #tpu.memory_space<vmem>>, vector<1x32x32xf32>
    %36 = vector.shape_cast %35 : vector<1x32x32xf32> to vector<32x32xf32>
    %cst_21 = arith.constant dense<0.000000e+00> : vector<128x32xf32>
    %37 = tpu.matmul %34, %36, %cst_21 {dimension_numbers = #tpu.dot_dimension_numbers<[1], [0], [0], [1], [0, 0, 1, 1], [], []>} : vector<128x32xf32>, vector<32x32xf32>, vector<128x32xf32> -> vector<128x32xf32>
    %38 = vector.extract_strided_slice %1 {offsets = [4, 0], sizes = [1, 32], strides = [1, 1]} : vector<5x32xf32> to vector<1x32xf32>
    %39 = vector.broadcast %38 : vector<1x32xf32> to vector<128x32xf32>
    %40 = arith.addf %37, %39 : vector<128x32xf32>
    %41 = vector.extract_strided_slice %40 {offsets = [0, 0], sizes = [128, 4], strides = [1, 1]} : vector<128x32xf32> to vector<128x4xf32>
    %42 = vector.extract_strided_slice %40 {offsets = [0, 4], sizes = [128, 1], strides = [1, 1]} : vector<128x32xf32> to vector<128x1xf32>
    %43 = vector.broadcast %42 : vector<128x1xf32> to vector<128x4xf32>
    %44 = arith.addf %43, %41 : vector<128x4xf32>
    %45 = vector.shape_cast %41 : vector<128x4xf32> to vector<1x128x4xf32>
    %cst_22 = arith.constant dense<0.000000e+00> : vector<1xf32>
    %46 = vector.multi_reduction <add>, %45, %cst_22 [1, 2] : vector<1x128x4xf32> to vector<1xf32>
    %47 = vector.shape_cast %46 : vector<1xf32> to vector<1x1x1xf32>
    %48 = vector.extract %47[0, 0, 0] : f32 from vector<1x1x1xf32>
    %cst_23 = arith.constant 5.120000e+02 : f32
    %49 = arith.divf %48, %cst_23 : f32
    %50 = vector.broadcast %49 : f32 to vector<128x4xf32>
    %51 = arith.subf %44, %50 : vector<128x4xf32>
    %c0_24 = arith.constant 0 : index
    %c0_25 = arith.constant 0 : index
    %52 = vector.load %arg3[%c0_24, %c0_25] : memref<128x4xf32, #tpu.memory_space<vmem>>, vector<128x4xf32>
    tpu.vector_store %arg3[%c0_24, %c0_25], %51 {strides = array<i32>} : memref<128x4xf32, #tpu.memory_space<vmem>>, vector<128x4xf32>,
    return
  }
}

</mosaic_0001>

<llo_original>
// kernel: tpu_custom_call.1
$region0: #{tpu_custom_call.1}
  #allocation0 [shape = 'u32[]', space=smem, size = 0x4, offset = 0x4, fixed_abs, tag = 'smem constant byte address 0x4 - core index']
  #allocation1 [shape = 'u32[72,128]{1,0:T(1,128)}', space=vmem, size = 0x9000, scoped, tag = 'internal scratch']
  %s0 = inlined_call_operand.vmem [shape: f32[128,16], index: 0, kind: input, shape index: {}]
  %s1 = inlined_call_operand.hbm [shape: f32[5,32,32], index: 1, kind: input, shape index: {}]
  %s2 = inlined_call_operand.vmem [shape: f32[5,32], index: 2, kind: input, shape index: {}]
  %s3 = inlined_call_operand.vmem [shape: f32[128,4], index: 3, kind: output, shape index: {}]
  %s4 = sld [smem:[#allocation0]]
  $region26: #{tpu_custom_call.1} parent=0
    _
  %s6 = ssub.s32 1, %s4
  %s7 = scalar_select 0, %s6, %s4
  $region1: #{tpu_custom_call.1} parent=0
    #allocation2 [shape = 'u8[81920]{0}', space=vmem, size = 0x14000, scoped, tag = 'input window, operand 1, single buffered']
    #allocation3 [shape = 's32[1]{0}', space=sflag, size = 0x4, scoped, tag = 'scoped memory for tpu_custom_call.1']
    %8 = vsyncpa [#allocation3], 0
    // Predicated region
    $region2: #{tpu_custom_call.1} parent=1 // pred_check
      _
    $region3: #{tpu_custom_call.1} parent=1 // pred_check_branch
      %10 = sbr.rel (0) target = $region5
    $region4: #{tpu_custom_call.1} parent=1 // pred_region
      _
    $region5: #{tpu_custom_call.1} parent=1 // pred_fallthru
      _
    // Predicated region
    $region6: #{tpu_custom_call.1} parent=1 // pred_check
      _
    $region7: #{tpu_custom_call.1} parent=1 // pred_check_branch
      %12 = sbr.rel (0) target = $region9
    $region8: #{tpu_custom_call.1} parent=1 // pred_region
      %14 = vsyncadd [#allocation3], 0
      %s15 = sshll.u32 %s1, 4
      %s16 = int_to_ptr.hbm [resolvable:$true] %s15
      %s17 = sshll.u32 [#allocation2], 4
      %s18 = int_to_ptr.vmem [resolvable:$true] %s17
      %23 = dma.hbm_to_vmem [thread:$0]  %s16, 2560, %s18, [#allocation3], 128, 128, 8
    $region9: #{tpu_custom_call.1} parent=1 // pred_fallthru
      _
    // Predicated region
    $region10: #{tpu_custom_call.1} parent=1 // pred_check
      _
    $region11: #{tpu_custom_call.1} parent=1 // pred_check_branch
      %25 = sbr.rel (0) target = $region13
    $region12: #{tpu_custom_call.1} parent=1 // pred_region
      _
    $region13: #{tpu_custom_call.1} parent=1 // pred_fallthru
      _
    // Predicated region
    $region14: #{tpu_custom_call.1} parent=1 // pred_check
      _
    $region15: #{tpu_custom_call.1} parent=1 // pred_check_branch
      %27 = sbr.rel (0) target = $region17
    $region16: #{tpu_custom_call.1} parent=1 // pred_region
      %29 = dma.done [#allocation3], 2560
    $region17: #{tpu_custom_call.1} parent=1 // pred_fallthru
      _
    %v30 = vld [vmem:[%s0] sm:$0xff]
    %v31 = vld [vmem:[%s0 + $0x8] sm:$0xff]
    %v32 = vld [vmem:[%s0 + $0x10] sm:$0xff]
    %v33 = vld [vmem:[%s0 + $0x18] sm:$0xff]
    %v34 = vld [vmem:[%s0 + $0x20] sm:$0xff]
    %v35 = vld [vmem:[%s0 + $0x28] sm:$0xff]
    %v36 = vld [vmem:[%s0 + $0x30] sm:$0xff]
    %v37 = vld [vmem:[%s0 + $0x38] sm:$0xff]
    %v38 = vld [vmem:[%s0 + $0x40] sm:$0xff]
    %v39 = vld [vmem:[%s0 + $0x48] sm:$0xff]
    %v40 = vld [vmem:[%s0 + $0x50] sm:$0xff]
    %v41 = vld [vmem:[%s0 + $0x58] sm:$0xff]
    %v42 = vld [vmem:[%s0 + $0x60] sm:$0xff]
    %v43 = vld [vmem:[%s0 + $0x68] sm:$0xff]
    %v44 = vld [vmem:[%s0 + $0x70] sm:$0xff]
    %v45 = vld [vmem:[%s0 + $0x78] sm:$0xff]
    %v46 = vld [vmem:[%s2] sm:$0x1f]
    %v47 = vld [vmem:[#allocation2] sm:$0xff]
    %v48 = vld [vmem:[#allocation2 + $0x8] sm:$0xff]
    %v49 = vperm.slane %v46, 0
    %vm50 = vcmask 130048
    %v52 = vsel %vm50, %v30, 0
    %v55 = vsel %vm50, %v31, 0
    %v58 = vsel %vm50, %v32, 0
    %v61 = vsel %vm50, %v33, 0
    %v64 = vsel %vm50, %v34, 0
    %v67 = vsel %vm50, %v35, 0
    %v70 = vsel %vm50, %v36, 0
    %v73 = vsel %vm50, %v37, 0
    %v76 = vsel %vm50, %v38, 0
    %v79 = vsel %vm50, %v39, 0
    %v82 = vsel %vm50, %v40, 0
    %v85 = vsel %vm50, %v41, 0
    %v88 = vsel %vm50, %v42, 0
    %v91 = vsel %vm50, %v43, 0
    %v94 = vsel %vm50, %v44, 0
    %v97 = vsel %vm50, %v45, 0
    %99 = vmatpush.msra.mxu0 0.0
    %100 = vmatpush.msra.mxu0 0.0
    %101 = vmatpush.msra.mxu0 0.0
    %102 = vmatpush.msra.mxu0 0.0
    %103 = vmatpush.msra.mxu0 0.0
    %104 = vmatpush.msra.mxu0 0.0
    %105 = vmatpush.msra.mxu0 0.0
    %106 = vmatpush.msra.mxu0 0.0
    %107 = vmatpush.msra.mxu0 0.0
    %108 = vmatpush.msra.mxu0 0.0
    %109 = vmatpush.msra.mxu0 0.0
    %110 = vmatpush.msra.mxu0 0.0
    %111 = vmatpush.msra.mxu0 0.0
    %112 = vmatpush.msra.mxu0 0.0
    %113 = vmatpush.msra.mxu0 %v48
    %114 = vmatpush.msra.mxu0 %v47
    %115 = vmatmul.f32.gmra.mxu0 %v52
    %v116 = vpop.f32.mrf.mxu0
    %v117 = vadd.f32 %v49, %v116
    %118 = vmatmul.f32.gmra.mxu0 %v55
    %v119 = vpop.f32.mrf.mxu0
    %v120 = vadd.f32 %v49, %v119
    %121 = vmatmul.f32.gmra.mxu0 %v58
    %v122 = vpop.f32.mrf.mxu0
    %v123 = vadd.f32 %v49, %v122
    %124 = vmatmul.f32.gmra.mxu0 %v61
    %v125 = vpop.f32.mrf.mxu0
    %v126 = vadd.f32 %v49, %v125
    %127 = vmatmul.f32.gmra.mxu0 %v64
    %v128 = vpop.f32.mrf.mxu0
    %v129 = vadd.f32 %v49, %v128
    %130 = vmatmul.f32.gmra.mxu0 %v67
    %v131 = vpop.f32.mrf.mxu0
    %v132 = vadd.f32 %v49, %v131
    %133 = vmatmul.f32.gmra.mxu0 %v70
    %v134 = vpop.f32.mrf.mxu0
    %v135 = vadd.f32 %v49, %v134
    %136 = vmatmul.f32.gmra.mxu0 %v73
    %v137 = vpop.f32.mrf.mxu0
    %v138 = vadd.f32 %v49, %v137
    %139 = vmatmul.f32.gmra.mxu0 %v76
    %v140 = vpop.f32.mrf.mxu0
    %v141 = vadd.f32 %v49, %v140
    %142 = vmatmul.f32.gmra.mxu0 %v79
    %v143 = vpop.f32.mrf.mxu0
    %v144 = vadd.f32 %v49, %v143
    %145 = vmatmul.f32.gmra.mxu0 %v82
    %v146 = vpop.f32.mrf.mxu0
    %v147 = vadd.f32 %v49, %v146
    %148 = vmatmul.f32.gmra.mxu0 %v85
    %v149 = vpop.f32.mrf.mxu0
    %v150 = vadd.f32 %v49, %v149
    %151 = vmatmul.f32.gmra.mxu0 %v88
    %v152 = vpop.f32.mrf.mxu0
    %v153 = vadd.f32 %v49, %v152
    %154 = vmatmul.f32.gmra.mxu0 %v91
    %v155 = vpop.f32.mrf.mxu0
    %v156 = vadd.f32 %v49, %v155
    %157 = vmatmul.f32.gmra.mxu0 %v94
    %v158 = vpop.f32.mrf.mxu0
    %v159 = vadd.f32 %v49, %v158
    %160 = vmatmul.f32.gmra.mxu0 %v97
    %v161 = vpop.f32.mrf.mxu0
    %v162 = vadd.f32 %v49, %v161
    %163 = vdwg.mxu0
    %v164 = vmax.f32 %v117, 0.0
    %v165 = vmax.f32 %v120, 0.0
    %v166 = vmax.f32 %v123, 0.0
    %v167 = vmax.f32 %v126, 0.0
    %v168 = vmax.f32 %v129, 0.0
    %v169 = vmax.f32 %v132, 0.0
    %v170 = vmax.f32 %v135, 0.0
    %v171 = vmax.f32 %v138, 0.0
    %v172 = vmax.f32 %v141, 0.0
    %v173 = vmax.f32 %v144, 0.0
    %v174 = vmax.f32 %v147, 0.0
    %v175 = vmax.f32 %v150, 0.0
    %v176 = vmax.f32 %v153, 0.0
    %v177 = vmax.f32 %v156, 0.0
    %v178 = vmax.f32 %v159, 0.0
    %v179 = vmax.f32 %v162, 0.0
    %s180 = scalar_lea.vmem [#allocation2], 32
    %v181 = vld [vmem:[%s180] sm:$0xff]
    %v182 = vld [vmem:[%s180 + $0x8] sm:$0xff]
    %v183 = vld [vmem:[%s180 + $0x10] sm:$0xff]
    %v184 = vld [vmem:[%s180 + $0x18] sm:$0xff]
    %v185 = vperm.slane %v46, 1
    %vm186 = vcmask 261120
    %v188 = vsel %vm186, %v164, 0
    %v191 = vsel %vm186, %v165, 0
    %v194 = vsel %vm186, %v166, 0
    %v197 = vsel %vm186, %v167, 0
    %v200 = vsel %vm186, %v168, 0
    %v203 = vsel %vm186, %v169, 0
    %v206 = vsel %vm186, %v170, 0
    %v209 = vsel %vm186, %v171, 0
    %v212 = vsel %vm186, %v172, 0
    %v215 = vsel %vm186, %v173, 0
    %v218 = vsel %vm186, %v174, 0
    %v221 = vsel %vm186, %v175, 0
    %v224 = vsel %vm186, %v176, 0
    %v227 = vsel %vm186, %v177, 0
    %v230 = vsel %vm186, %v178, 0
    %v233 = vsel %vm186, %v179, 0
    %235 = vmatpush.msra.mxu0 0.0
    %236 = vmatpush.msra.mxu0 0.0
    %237 = vmatpush.msra.mxu0 0.0
    %238 = vmatpush.msra.mxu0 0.0
    %239 = vmatpush.msra.mxu0 0.0
    %240 = vmatpush.msra.mxu0 0.0
    %241 = vmatpush.msra.mxu0 0.0
    %242 = vmatpush.msra.mxu0 0.0
    %243 = vmatpush.msra.mxu0 0.0
    %244 = vmatpush.msra.mxu0 0.0
    %245 = vmatpush.msra.mxu0 0.0
    %246 = vmatpush.msra.mxu0 0.0
    %247 = vmatpush.msra.mxu0 %v184
    %248 = vmatpush.msra.mxu0 %v183
    %249 = vmatpush.msra.mxu0 %v182
    %250 = vmatpush.msra.mxu0 %v181
    %251 = vmatmul.f32.gmra.mxu0 %v188
    %v252 = vpop.f32.mrf.mxu0
    %v253 = vadd.f32 %v185, %v252
    %254 = vmatmul.f32.gmra.mxu0 %v191
    %v255 = vpop.f32.mrf.mxu0
    %v256 = vadd.f32 %v185, %v255
    %257 = vmatmul.f32.gmra.mxu0 %v194
    %v258 = vpop.f32.mrf.mxu0
    %v259 = vadd.f32 %v185, %v258
    %260 = vmatmul.f32.gmra.mxu0 %v197
    %v261 = vpop.f32.mrf.mxu0
    %v262 = vadd.f32 %v185, %v261
    %263 = vmatmul.f32.gmra.mxu0 %v200
    %v264 = vpop.f32.mrf.mxu0
    %v265 = vadd.f32 %v185, %v264
    %266 = vmatmul.f32.gmra.mxu0 %v203
    %v267 = vpop.f32.mrf.mxu0
    %v268 = vadd.f32 %v185, %v267
    %269 = vmatmul.f32.gmra.mxu0 %v206
    %v270 = vpop.f32.mrf.mxu0
    %v271 = vadd.f32 %v185, %v270
    %272 = vmatmul.f32.gmra.mxu0 %v209
    %v273 = vpop.f32.mrf.mxu0
    %v274 = vadd.f32 %v185, %v273
    %275 = vmatmul.f32.gmra.mxu0 %v212
    %v276 = vpop.f32.mrf.mxu0
    %v277 = vadd.f32 %v185, %v276
    %278 = vmatmul.f32.gmra.mxu0 %v215
    %v279 = vpop.f32.mrf.mxu0
    %v280 = vadd.f32 %v185, %v279
    %281 = vmatmul.f32.gmra.mxu0 %v218
    %v282 = vpop.f32.mrf.mxu0
    %v283 = vadd.f32 %v185, %v282
    %284 = vmatmul.f32.gmra.mxu0 %v221
    %v285 = vpop.f32.mrf.mxu0
    %v286 = vadd.f32 %v185, %v285
    %287 = vmatmul.f32.gmra.mxu0 %v224
    %v288 = vpop.f32.mrf.mxu0
    %v289 = vadd.f32 %v185, %v288
    %290 = vmatmul.f32.gmra.mxu0 %v227
    %v291 = vpop.f32.mrf.mxu0
    %v292 = vadd.f32 %v185, %v291
    %293 = vmatmul.f32.gmra.mxu0 %v230
    %v294 = vpop.f32.mrf.mxu0
    %v295 = vadd.f32 %v185, %v294
    %296 = vmatmul.f32.gmra.mxu0 %v233
    %v297 = vpop.f32.mrf.mxu0
    %v298 = vadd.f32 %v185, %v297
    %299 = vdwg.mxu0
    %v300 = vmax.f32 %v253, 0.0
    %v301 = vmax.f32 %v256, 0.0
    %v302 = vmax.f32 %v259, 0.0
    %v303 = vmax.f32 %v262, 0.0
    %v304 = vmax.f32 %v265, 0.0
    %v305 = vmax.f32 %v268, 0.0
    %v306 = vmax.f32 %v271, 0.0
    %v307 = vmax.f32 %v274, 0.0
    %v308 = vmax.f32 %v277, 0.0
    %v309 = vmax.f32 %v280, 0.0
    %v310 = vmax.f32 %v283, 0.0
    %v311 = vmax.f32 %v286, 0.0
    %v312 = vmax.f32 %v289, 0.0
    %v313 = vmax.f32 %v292, 0.0
    %v314 = vmax.f32 %v295, 0.0
    %v315 = vmax.f32 %v298, 0.0
    %s316 = scalar_lea.vmem [#allocation2], 64
    %v317 = vld [vmem:[%s316] sm:$0xff]
    %v318 = vld [vmem:[%s316 + $0x8] sm:$0xff]
    %v319 = vld [vmem:[%s316 + $0x10] sm:$0xff]
    %v320 = vld [vmem:[%s316 + $0x18] sm:$0xff]
    %v321 = vperm.slane %v46, 2
    %v323 = vsel %vm186, %v300, 0
    %v326 = vsel %vm186, %v301, 0
    %v329 = vsel %vm186, %v302, 0
    %v332 = vsel %vm186, %v303, 0
    %v335 = vsel %vm186, %v304, 0
    %v338 = vsel %vm186, %v305, 0
    %v341 = vsel %vm186, %v306, 0
    %v344 = vsel %vm186, %v307, 0
    %v347 = vsel %vm186, %v308, 0
    %v350 = vsel %vm186, %v309, 0
    %v353 = vsel %vm186, %v310, 0
    %v356 = vsel %vm186, %v311, 0
    %v359 = vsel %vm186, %v312, 0
    %v362 = vsel %vm186, %v313, 0
    %v365 = vsel %vm186, %v314, 0
    %v368 = vsel %vm186, %v315, 0
    %370 = vmatpush.msra.mxu0 0.0
    %371 = vmatpush.msra.mxu0 0.0
    %372 = vmatpush.msra.mxu0 0.0
    %373 = vmatpush.msra.mxu0 0.0
    %374 = vmatpush.msra.mxu0 0.0
    %375 = vmatpush.msra.mxu0 0.0
    %376 = vmatpush.msra.mxu0 0.0
    %377 = vmatpush.msra.mxu0 0.0
    %378 = vmatpush.msra.mxu0 0.0
    %379 = vmatpush.msra.mxu0 0.0
    %380 = vmatpush.msra.mxu0 0.0
    %381 = vmatpush.msra.mxu0 0.0
    %382 = vmatpush.msra.mxu0 %v320
    %383 = vmatpush.msra.mxu0 %v319
    %384 = vmatpush.msra.mxu0 %v318
    %385 = vmatpush.msra.mxu0 %v317
    %386 = vmatmul.f32.gmra.mxu0 %v323
    %v387 = vpop.f32.mrf.mxu0
    %v388 = vadd.f32 %v321, %v387
    %389 = vmatmul.f32.gmra.mxu0 %v326
    %v390 = vpop.f32.mrf.mxu0
    %v391 = vadd.f32 %v321, %v390
    %392 = vmatmul.f32.gmra.mxu0 %v329
    %v393 = vpop.f32.mrf.mxu0
    %v394 = vadd.f32 %v321, %v393
    %395 = vmatmul.f32.gmra.mxu0 %v332
    %v396 = vpop.f32.mrf.mxu0
    %v397 = vadd.f32 %v321, %v396
    %398 = vmatmul.f32.gmra.mxu0 %v335
    %v399 = vpop.f32.mrf.mxu0
    %v400 = vadd.f32 %v321, %v399
    %401 = vmatmul.f32.gmra.mxu0 %v338
    %v402 = vpop.f32.mrf.mxu0
    %v403 = vadd.f32 %v321, %v402
    %404 = vmatmul.f32.gmra.mxu0 %v341
    %v405 = vpop.f32.mrf.mxu0
    %v406 = vadd.f32 %v321, %v405
    %407 = vmatmul.f32.gmra.mxu0 %v344
    %v408 = vpop.f32.mrf.mxu0
    %v409 = vadd.f32 %v321, %v408
    %410 = vmatmul.f32.gmra.mxu0 %v347
    %v411 = vpop.f32.mrf.mxu0
    %v412 = vadd.f32 %v321, %v411
    %413 = vmatmul.f32.gmra.mxu0 %v350
    %v414 = vpop.f32.mrf.mxu0
    %v415 = vadd.f32 %v321, %v414
    %416 = vmatmul.f32.gmra.mxu0 %v353
    %v417 = vpop.f32.mrf.mxu0
    %v418 = vadd.f32 %v321, %v417
    %419 = vmatmul.f32.gmra.mxu0 %v356
    %v420 = vpop.f32.mrf.mxu0
    %v421 = vadd.f32 %v321, %v420
    %422 = vmatmul.f32.gmra.mxu0 %v359
    %v423 = vpop.f32.mrf.mxu0
    %v424 = vadd.f32 %v321, %v423
    %425 = vmatmul.f32.gmra.mxu0 %v362
    %v426 = vpop.f32.mrf.mxu0
    %v427 = vadd.f32 %v321, %v426
    %428 = vmatmul.f32.gmra.mxu0 %v365
    %v429 = vpop.f32.mrf.mxu0
    %v430 = vadd.f32 %v321, %v429
    %431 = vmatmul.f32.gmra.mxu0 %v368
    %v432 = vpop.f32.mrf.mxu0
    %v433 = vadd.f32 %v321, %v432
    %434 = vdwg.mxu0
    %v435 = vmax.f32 %v388, 0.0
    %v436 = vmax.f32 %v391, 0.0
    %v437 = vmax.f32 %v394, 0.0
    %v438 = vmax.f32 %v397, 0.0
    %v439 = vmax.f32 %v400, 0.0
    %v440 = vmax.f32 %v403, 0.0
    %v441 = vmax.f32 %v406, 0.0
    %v442 = vmax.f32 %v409, 0.0
    %v443 = vmax.f32 %v412, 0.0
    %v444 = vmax.f32 %v415, 0.0
    %v445 = vmax.f32 %v418, 0.0
    %v446 = vmax.f32 %v421, 0.0
    %v447 = vmax.f32 %v424, 0.0
    %v448 = vmax.f32 %v427, 0.0
    %v449 = vmax.f32 %v430, 0.0
    %v450 = vmax.f32 %v433, 0.0
    %s451 = scalar_lea.vmem [#allocation2], 96
    %v452 = vld [vmem:[%s451] sm:$0xff]
    %v453 = vld [vmem:[%s451 + $0x8] sm:$0xff]
    %v454 = vld [vmem:[%s451 + $0x10] sm:$0xff]
    %v455 = vld [vmem:[%s451 + $0x18] sm:$0xff]
    %v456 = vperm.slane %v46, 3
    %v458 = vsel %vm186, %v435, 0
    %v461 = vsel %vm186, %v436, 0
    %v464 = vsel %vm186, %v437, 0
    %v467 = vsel %vm186, %v438, 0
    %v470 = vsel %vm186, %v439, 0
    %v473 = vsel %vm186, %v440, 0
    %v476 = vsel %vm186, %v441, 0
    %v479 = vsel %vm186, %v442, 0
    %v482 = vsel %vm186, %v443, 0
    %v485 = vsel %vm186, %v444, 0
    %v488 = vsel %vm186, %v445, 0
    %v491 = vsel %vm186, %v446, 0
    %v494 = vsel %vm186, %v447, 0
    %v497 = vsel %vm186, %v448, 0
    %v500 = vsel %vm186, %v449, 0
    %v503 = vsel %vm186, %v450, 0
    %505 = vmatpush.msra.mxu0 0.0
    %506 = vmatpush.msra.mxu0 0.0
    %507 = vmatpush.msra.mxu0 0.0
    %508 = vmatpush.msra.mxu0 0.0
    %509 = vmatpush.msra.mxu0 0.0
    %510 = vmatpush.msra.mxu0 0.0
    %511 = vmatpush.msra.mxu0 0.0
    %512 = vmatpush.msra.mxu0 0.0
    %513 = vmatpush.msra.mxu0 0.0
    %514 = vmatpush.msra.mxu0 0.0
    %515 = vmatpush.msra.mxu0 0.0
    %516 = vmatpush.msra.mxu0 0.0
    %517 = vmatpush.msra.mxu0 %v455
    %518 = vmatpush.msra.mxu0 %v454
    %519 = vmatpush.msra.mxu0 %v453
    %520 = vmatpush.msra.mxu0 %v452
    %521 = vmatmul.f32.gmra.mxu0 %v458
    %v522 = vpop.f32.mrf.mxu0
    %v523 = vadd.f32 %v456, %v522
    %524 = vmatmul.f32.gmra.mxu0 %v461
    %v525 = vpop.f32.mrf.mxu0
    %v526 = vadd.f32 %v456, %v525
    %527 = vmatmul.f32.gmra.mxu0 %v464
    %v528 = vpop.f32.mrf.mxu0
    %v529 = vadd.f32 %v456, %v528
    %530 = vmatmul.f32.gmra.mxu0 %v467
    %v531 = vpop.f32.mrf.mxu0
    %v532 = vadd.f32 %v456, %v531
    %533 = vmatmul.f32.gmra.mxu0 %v470
    %v534 = vpop.f32.mrf.mxu0
    %v535 = vadd.f32 %v456, %v534
    %536 = vmatmul.f32.gmra.mxu0 %v473
    %v537 = vpop.f32.mrf.mxu0
    %v538 = vadd.f32 %v456, %v537
    %539 = vmatmul.f32.gmra.mxu0 %v476
    %v540 = vpop.f32.mrf.mxu0
    %v541 = vadd.f32 %v456, %v540
    %542 = vmatmul.f32.gmra.mxu0 %v479
    %v543 = vpop.f32.mrf.mxu0
    %v544 = vadd.f32 %v456, %v543
    %545 = vmatmul.f32.gmra.mxu0 %v482
    %v546 = vpop.f32.mrf.mxu0
    %v547 = vadd.f32 %v456, %v546
    %548 = vmatmul.f32.gmra.mxu0 %v485
    %v549 = vpop.f32.mrf.mxu0
    %v550 = vadd.f32 %v456, %v549
    %551 = vmatmul.f32.gmra.mxu0 %v488
    %v552 = vpop.f32.mrf.mxu0
    %v553 = vadd.f32 %v456, %v552
    %554 = vmatmul.f32.gmra.mxu0 %v491
    %v555 = vpop.f32.mrf.mxu0
    %v556 = vadd.f32 %v456, %v555
    %557 = vmatmul.f32.gmra.mxu0 %v494
    %v558 = vpop.f32.mrf.mxu0
    %v559 = vadd.f32 %v456, %v558
    %560 = vmatmul.f32.gmra.mxu0 %v497
    %v561 = vpop.f32.mrf.mxu0
    %v562 = vadd.f32 %v456, %v561
    %563 = vmatmul.f32.gmra.mxu0 %v500
    %v564 = vpop.f32.mrf.mxu0
    %v565 = vadd.f32 %v456, %v564
    %566 = vmatmul.f32.gmra.mxu0 %v503
    %v567 = vpop.f32.mrf.mxu0
    %v568 = vadd.f32 %v456, %v567
    %569 = vdwg.mxu0
    %v570 = vmax.f32 %v523, 0.0
    %v571 = vmax.f32 %v526, 0.0
    %v572 = vmax.f32 %v529, 0.0
    %v573 = vmax.f32 %v532, 0.0
    %v574 = vmax.f32 %v535, 0.0
    %v575 = vmax.f32 %v538, 0.0
    %v576 = vmax.f32 %v541, 0.0
    %v577 = vmax.f32 %v544, 0.0
    %v578 = vmax.f32 %v547, 0.0
    %v579 = vmax.f32 %v550, 0.0
    %v580 = vmax.f32 %v553, 0.0
    %v581 = vmax.f32 %v556, 0.0
    %v582 = vmax.f32 %v559, 0.0
    %v583 = vmax.f32 %v562, 0.0
    %v584 = vmax.f32 %v565, 0.0
    %v585 = vmax.f32 %v568, 0.0
    %s586 = scalar_lea.vmem [#allocation2], 128
    %v587 = vld [vmem:[%s586] sm:$0xff]
    %v588 = vld [vmem:[%s586 + $0x8] sm:$0xff]
    %v589 = vld [vmem:[%s586 + $0x10] sm:$0xff]
    %v590 = vld [vmem:[%s586 + $0x18] sm:$0xff]
    %v591 = vperm.slane %v46, 4
    %v593 = vsel %vm186, %v570, 0
    %v596 = vsel %vm186, %v571, 0
    %v599 = vsel %vm186, %v572, 0
    %v602 = vsel %vm186, %v573, 0
    %v605 = vsel %vm186, %v574, 0
    %v608 = vsel %vm186, %v575, 0
    %v611 = vsel %vm186, %v576, 0
    %v614 = vsel %vm186, %v577, 0
    %v617 = vsel %vm186, %v578, 0
    %v620 = vsel %vm186, %v579, 0
    %v623 = vsel %vm186, %v580, 0
    %v626 = vsel %vm186, %v581, 0
    %v629 = vsel %vm186, %v582, 0
    %v632 = vsel %vm186, %v583, 0
    %v635 = vsel %vm186, %v584, 0
    %v638 = vsel %vm186, %v585, 0
    %640 = vmatpush.msra.mxu0 0.0
    %641 = vmatpush.msra.mxu0 0.0
    %642 = vmatpush.msra.mxu0 0.0
    %643 = vmatpush.msra.mxu0 0.0
    %644 = vmatpush.msra.mxu0 0.0
    %645 = vmatpush.msra.mxu0 0.0
    %646 = vmatpush.msra.mxu0 0.0
    %647 = vmatpush.msra.mxu0 0.0
    %648 = vmatpush.msra.mxu0 0.0
    %649 = vmatpush.msra.mxu0 0.0
    %650 = vmatpush.msra.mxu0 0.0
    %651 = vmatpush.msra.mxu0 0.0
    %652 = vmatpush.msra.mxu0 %v590
    %653 = vmatpush.msra.mxu0 %v589
    %654 = vmatpush.msra.mxu0 %v588
    %655 = vmatpush.msra.mxu0 %v587
    %656 = vmatmul.f32.gmra.mxu0 %v593
    %v657 = vpop.f32.mrf.mxu0
    %v658 = vadd.f32 %v591, %v657
    %659 = vmatmul.f32.gmra.mxu0 %v596
    %v660 = vpop.f32.mrf.mxu0
    %v661 = vadd.f32 %v591, %v660
    %662 = vmatmul.f32.gmra.mxu0 %v599
    %v663 = vpop.f32.mrf.mxu0
    %v664 = vadd.f32 %v591, %v663
    %665 = vmatmul.f32.gmra.mxu0 %v602
    %v666 = vpop.f32.mrf.mxu0
    %v667 = vadd.f32 %v591, %v666
    %668 = vmatmul.f32.gmra.mxu0 %v605
    %v669 = vpop.f32.mrf.mxu0
    %v670 = vadd.f32 %v591, %v669
    %671 = vmatmul.f32.gmra.mxu0 %v608
    %v672 = vpop.f32.mrf.mxu0
    %v673 = vadd.f32 %v591, %v672
    %674 = vmatmul.f32.gmra.mxu0 %v611
    %v675 = vpop.f32.mrf.mxu0
    %v676 = vadd.f32 %v591, %v675
    %677 = vmatmul.f32.gmra.mxu0 %v614
    %v678 = vpop.f32.mrf.mxu0
    %v679 = vadd.f32 %v591, %v678
    %680 = vmatmul.f32.gmra.mxu0 %v617
    %v681 = vpop.f32.mrf.mxu0
    %v682 = vadd.f32 %v591, %v681
    %683 = vmatmul.f32.gmra.mxu0 %v620
    %v684 = vpop.f32.mrf.mxu0
    %v685 = vadd.f32 %v591, %v684
    %686 = vmatmul.f32.gmra.mxu0 %v623
    %v687 = vpop.f32.mrf.mxu0
    %v688 = vadd.f32 %v591, %v687
    %689 = vmatmul.f32.gmra.mxu0 %v626
    %v690 = vpop.f32.mrf.mxu0
    %v691 = vadd.f32 %v591, %v690
    %692 = vmatmul.f32.gmra.mxu0 %v629
    %v693 = vpop.f32.mrf.mxu0
    %v694 = vadd.f32 %v591, %v693
    %695 = vmatmul.f32.gmra.mxu0 %v632
    %v696 = vpop.f32.mrf.mxu0
    %v697 = vadd.f32 %v591, %v696
    %698 = vmatmul.f32.gmra.mxu0 %v635
    %v699 = vpop.f32.mrf.mxu0
    %v700 = vadd.f32 %v591, %v699
    %701 = vmatmul.f32.gmra.mxu0 %v638
    %v702 = vpop.f32.mrf.mxu0
    %v703 = vadd.f32 %v591, %v702
    %704 = vdwg.mxu0
    %706 = vset.pattern.permute.xlu0 4
    %707 = vperm.xlu0 %706, %v658
    %v708 = vpop.permute.xlu0 %707
    %711 = vset.pattern.permute.xlu0 4
    %712 = vperm.xlu0 %711, %v661
    %v713 = vpop.permute.xlu0 %712
    %716 = vset.pattern.permute.xlu0 4
    %717 = vperm.xlu0 %716, %v664
    %v718 = vpop.permute.xlu0 %717
    %721 = vset.pattern.permute.xlu0 4
    %722 = vperm.xlu0 %721, %v667
    %v723 = vpop.permute.xlu0 %722
    %726 = vset.pattern.permute.xlu0 4
    %727 = vperm.xlu0 %726, %v670
    %v728 = vpop.permute.xlu0 %727
    %731 = vset.pattern.permute.xlu0 4
    %732 = vperm.xlu0 %731, %v673
    %v733 = vpop.permute.xlu0 %732
    %736 = vset.pattern.permute.xlu0 4
    %737 = vperm.xlu0 %736, %v676
    %v738 = vpop.permute.xlu0 %737
    %741 = vset.pattern.permute.xlu0 4
    %742 = vperm.xlu0 %741, %v679
    %v743 = vpop.permute.xlu0 %742
    %746 = vset.pattern.permute.xlu0 4
    %747 = vperm.xlu0 %746, %v682
    %v748 = vpop.permute.xlu0 %747
    %751 = vset.pattern.permute.xlu0 4
    %752 = vperm.xlu0 %751, %v685
    %v753 = vpop.permute.xlu0 %752
    %756 = vset.pattern.permute.xlu0 4
    %757 = vperm.xlu0 %756, %v688
    %v758 = vpop.permute.xlu0 %757
    %761 = vset.pattern.permute.xlu0 4
    %762 = vperm.xlu0 %761, %v691
    %v763 = vpop.permute.xlu0 %762
    %766 = vset.pattern.permute.xlu0 4
    %767 = vperm.xlu0 %766, %v694
    %v768 = vpop.permute.xlu0 %767
    %771 = vset.pattern.permute.xlu0 4
    %772 = vperm.xlu0 %771, %v697
    %v773 = vpop.permute.xlu0 %772
    %776 = vset.pattern.permute.xlu0 4
    %777 = vperm.xlu0 %776, %v700
    %v778 = vpop.permute.xlu0 %777
    %781 = vset.pattern.permute.xlu0 4
    %782 = vperm.xlu0 %781, %v703
    %v783 = vpop.permute.xlu0 %782
    %v785 = vadd.f32 %v708, %v658
    %v786 = vadd.f32 %v713, %v661
    %v787 = vadd.f32 %v718, %v664
    %v788 = vadd.f32 %v723, %v667
    %v789 = vadd.f32 %v728, %v670
    %v790 = vadd.f32 %v733, %v673
    %v791 = vadd.f32 %v738, %v676
    %v792 = vadd.f32 %v743, %v679
    %v793 = vadd.f32 %v748, %v682
    %v794 = vadd.f32 %v753, %v685
    %v795 = vadd.f32 %v758, %v688
    %v796 = vadd.f32 %v763, %v691
    %v797 = vadd.f32 %v768, %v694
    %v798 = vadd.f32 %v773, %v697
    %v799 = vadd.f32 %v778, %v700
    %v800 = vadd.f32 %v783, %v703
    %vm801 = vcmask 31744
    %v802 = vsel %vm801, %v658, 0.0
    %v803 = vsel %vm801, %v661, 0.0
    %v804 = vadd.f32 %v802, %v803
    %v805 = vsel %vm801, %v664, 0.0
    %v806 = vadd.f32 %v804, %v805
    %v807 = vsel %vm801, %v667, 0.0
    %v808 = vadd.f32 %v806, %v807
    %v809 = vsel %vm801, %v670, 0.0
    %v810 = vadd.f32 %v808, %v809
    %v811 = vsel %vm801, %v673, 0.0
    %v812 = vadd.f32 %v810, %v811
    %v813 = vsel %vm801, %v676, 0.0
    %v814 = vadd.f32 %v812, %v813
    %v815 = vsel %vm801, %v679, 0.0
    %v816 = vadd.f32 %v814, %v815
    %v817 = vsel %vm801, %v682, 0.0
    %v818 = vadd.f32 %v816, %v817
    %v819 = vsel %vm801, %v685, 0.0
    %v820 = vadd.f32 %v818, %v819
    %v821 = vsel %vm801, %v688, 0.0
    %v822 = vadd.f32 %v820, %v821
    %v823 = vsel %vm801, %v691, 0.0
    %v824 = vadd.f32 %v822, %v823
    %v825 = vsel %vm801, %v694, 0.0
    %v826 = vadd.f32 %v824, %v825
    %v827 = vsel %vm801, %v697, 0.0
    %v828 = vadd.f32 %v826, %v827
    %v829 = vsel %vm801, %v700, 0.0
    %v830 = vadd.f32 %v828, %v829
    %v831 = vsel %vm801, %v703, 0.0
    %v832 = vadd.f32 %v830, %v831
    %833 = vadd.xlane.f32.xlu0 %v832
    %v834 = vpop.xlane.xlu0 %833
    %v835 = vrot.slane %v834, 4
    %v836 = vadd.f32 %v834, %v835
    %v837 = vrot.slane %v836, 2
    %v838 = vadd.f32 %v836, %v837
    %v839 = vrot.slane %v838, 1
    %v840 = vadd.f32 %v838, %v839
    %s841 = vtos %v840
    %v842 = vrcp.pop 512.0
    %v843 = vmul.f32 512.0, %v842
    %v844 = vsub.f32 1.0, %v843
    %v845 = vmul.f32 %v842, %v844
    %v846 = vadd.f32 %v842, %v845
    %vm847 = vweird.f32 %v842
    %v848 = vsel %vm847, %v842, %v846
    %s849 = vtos %v848
    %s850 = smul.f32 %s841, %s849
    %v851 = vstv %s850
    %v852 = vsub.f32 %v785, %v851
    %v853 = vsub.f32 %v786, %v851
    %v854 = vsub.f32 %v787, %v851
    %v855 = vsub.f32 %v788, %v851
    %v856 = vsub.f32 %v789, %v851
    %v857 = vsub.f32 %v790, %v851
    %v858 = vsub.f32 %v791, %v851
    %v859 = vsub.f32 %v792, %v851
    %v860 = vsub.f32 %v793, %v851
    %v861 = vsub.f32 %v794, %v851
    %v862 = vsub.f32 %v795, %v851
    %v863 = vsub.f32 %v796, %v851
    %v864 = vsub.f32 %v797, %v851
    %v865 = vsub.f32 %v798, %v851
    %v866 = vsub.f32 %v799, %v851
    %v867 = vsub.f32 %v800, %v851
    %868 = vst.msk [vmem:[%s3] sm:$0xff] %vm801, %v852
    %869 = vst.msk [vmem:[%s3 + $0x8] sm:$0xff] %vm801, %v853
    %870 = vst.msk [vmem:[%s3 + $0x10] sm:$0xff] %vm801, %v854
    %871 = vst.msk [vmem:[%s3 + $0x18] sm:$0xff] %vm801, %v855
    %872 = vst.msk [vmem:[%s3 + $0x20] sm:$0xff] %vm801, %v856
    %873 = vst.msk [vmem:[%s3 + $0x28] sm:$0xff] %vm801, %v857
    %874 = vst.msk [vmem:[%s3 + $0x30] sm:$0xff] %vm801, %v858
    %875 = vst.msk [vmem:[%s3 + $0x38] sm:$0xff] %vm801, %v859
    %876 = vst.msk [vmem:[%s3 + $0x40] sm:$0xff] %vm801, %v860
    %877 = vst.msk [vmem:[%s3 + $0x48] sm:$0xff] %vm801, %v861
    %878 = vst.msk [vmem:[%s3 + $0x50] sm:$0xff] %vm801, %v862
    %879 = vst.msk [vmem:[%s3 + $0x58] sm:$0xff] %vm801, %v863
    %880 = vst.msk [vmem:[%s3 + $0x60] sm:$0xff] %vm801, %v864
    %881 = vst.msk [vmem:[%s3 + $0x68] sm:$0xff] %vm801, %v865
    %882 = vst.msk [vmem:[%s3 + $0x70] sm:$0xff] %vm801, %v866
    %883 = vst.msk [vmem:[%s3 + $0x78] sm:$0xff] %vm801, %v867
    // Predicated region
    $region18: #{tpu_custom_call.1} parent=1 // pred_check
      _
    $region19: #{tpu_custom_call.1} parent=1 // pred_check_branch
      %885 = sbr.rel (0) target = $region21
    $region20: #{tpu_custom_call.1} parent=1 // pred_region
      _
    $region21: #{tpu_custom_call.1} parent=1 // pred_fallthru
      _
    // Predicated region
    $region22: #{tpu_custom_call.1} parent=1 // pred_check
      _
    $region23: #{tpu_custom_call.1} parent=1 // pred_check_branch
      %887 = sbr.rel (0) target = $region25
    $region24: #{tpu_custom_call.1} parent=1 // pred_region
      _
    $region25: #{tpu_custom_call.1} parent=1 // pred_fallthru
      _
    %888 = vsyncpa [#allocation3], 1

</llo_original>
